<compile_context>
chip_gen: v7x
topology: tpu7x:2x2x1
jax: 0.10.0
libtpu: 0.0.40
codegen_flags: <defaults>
</compile_context>

<pallas_src>
import numpy as np
import jax
import jax.numpy as jnp
from jax.experimental import pallas as pl
from jax.experimental.pallas import tpu as pltpu

# ------------------------- fixed architecture constants -------------------------
H, W, CIN = 16, 16, 1          # input image
C1, C2 = 8, 16                 # conv filter counts (module defaults)
Q1 = (H - 2) // 2              # pooled conv1 spatial extent = 7
HID, OUT_PAD = 128, 128        # fc1 width, lane-padded fc2 width

# packed-constants row layout (all offsets 8-aligned, 128 lanes)
B_OFF = 0                      # 3 x 16 rows : conv1 banded matrices, lanes 0:112
C_OFF = 48                     # 3 x 56 rows : conv2 banded matrices, lanes 0:64
FW1_OFF = 216                  # 64 rows     : fc1 weights, rows reordered per flatten
FW2_OFF = 280                  # 128 rows    : fc2 weights, zero-padded to 128 lanes
B1_ROW = 408                   # conv1 bias tiled over pooled columns, lanes 0:56
B2_ROW = 416                   # conv2 bias tiled over pooled columns, lanes 0:32
FB1_ROW = 424                  # fc1 bias, lanes 0:128
FB2_ROW = 432                  # fc2 bias, zero-padded
PROWS = 440


# ---------------- fused Pallas kernel: whole forward for ONE image ----------------

def fused_cnn_kernel(x_ref, p_ref, o_ref):
    """conv1+pool -> conv2+pool -> fc1 -> ReLU -> fc2, all resident in VMEM.

    x_ref: (16, 16)   one input image (Cin = 1)
    p_ref: (440, 128) packed constants (see row layout above)
    o_ref: (1, 128)   lane-padded output row (real outputs in lanes [:out_size])
    """
    f32 = jnp.float32

    # ---- conv1 (3x3 VALID) + 2x2 max-pool; bias+ReLU hoisted past the max ----
    # Rows of each dot are the 7 pooled output rows for one pool-row-offset `a`
    # (stride-2 row slices of the image).  The banded matrix B_di contracts the
    # 16 image columns into (even|odd output col) x (7 pooled cols) x (8 ch).
    yrow = []
    for a in range(2):                                     # pool row offset
        acc = None
        for di in range(3):                                # conv tap row
            xs = x_ref[pl.ds(a + di, Q1, 2), :]            # (7, 16): rows 2p + a + di
            bd = p_ref[B_OFF + 16 * di:B_OFF + 16 * (di + 1), 0:2 * Q1 * C1]
            t = jnp.dot(xs, bd, preferred_element_type=f32)          # (7, 112)
            acc = t if acc is None else acc + t
        yrow.append(acc)
    y = jnp.maximum(yrow[0], yrow[1])                      # max over pool rows
    y = jnp.maximum(y[:, 0:Q1 * C1], y[:, Q1 * C1:2 * Q1 * C1])      # max over pool cols
    a1 = jnp.maximum(y + p_ref[B1_ROW:B1_ROW + 1, 0:Q1 * C1], 0.0)   # (7, 56) = (i1, j1*8+c1)

    # ---- conv2 (3x3 VALID) + 2x2 max-pool ----
    # Accumulate over tap rows: contiguous 4-row slices of a1 against banded
    # C_di matrices that contract the (j1, c1) lanes into (even|odd q2, qq, c2).
    z = None
    for di in range(3):
        cd = p_ref[C_OFF + 56 * di:C_OFF + 56 * (di + 1), 0:4 * C2]
        t = jnp.dot(a1[di:di + 4, :], cd, preferred_element_type=f32)     # (4, 64)
        z = t if z is None else z + t
    zp = jnp.concatenate([jnp.maximum(z[0:1, :], z[1:2, :]),
                          jnp.maximum(z[2:3, :], z[3:4, :])], axis=0)     # pool rows -> (2, 64)
    zp = jnp.maximum(zp[:, 0:2 * C2], zp[:, 2 * C2:4 * C2])               # pool cols -> (2, 32)
    a2 = jnp.maximum(zp + p_ref[B2_ROW:B2_ROW + 1, 0:2 * C2], 0.0)        # rows=pp, lanes=qq*16+c2

    # ---- flatten (NCHW order folded into fw1 row order) -> fc1 -> ReLU -> fc2 ----
    h = jnp.dot(a2[0:1, :], p_ref[FW1_OFF:FW1_OFF + 2 * C2, :],
                preferred_element_type=f32)
    h = h + jnp.dot(a2[1:2, :], p_ref[FW1_OFF + 2 * C2:FW1_OFF + 4 * C2, :],
                    preferred_element_type=f32)
    h = jnp.maximum(h + p_ref[FB1_ROW:FB1_ROW + 1, :], 0.0)               # (1, 128)
    out = jnp.dot(h, p_ref[FW2_OFF:FW2_OFF + HID, :], preferred_element_type=f32)
    o_ref[...] = out + p_ref[FB2_ROW:FB2_ROW + 1, :]


# ---------------- one-time parameter packing (off the hot path, O(1) in batch) ----------------

def prepare_params(params):
    """Pack all weights/biases into ONE (440, 128) f32 array of banded matmul
    operands + pre-split fc blocks.  Batch-independent."""
    w1, b1, w2, b2, fw1, fb1, fw2, fb2 = [np.asarray(p, np.float32) for p in params]
    out_size = fw2.shape[1]
    p = np.zeros((PROWS, 128), np.float32)

    # conv1 banded matrices B_di: contract 16 image cols -> (even|odd j) x q x c1
    for di in range(3):
        for e in range(2):
            for q in range(Q1):
                for dj in range(3):
                    j_in = 2 * q + e + dj
                    p[B_OFF + 16 * di + j_in,
                      e * Q1 * C1 + q * C1: e * Q1 * C1 + (q + 1) * C1] = w1[:, 0, di, dj]
    p[B1_ROW, 0:Q1 * C1] = np.tile(b1, Q1)

    # conv2 banded matrices C_di: contract (j1, c1) lanes -> (even|odd q2) x qq x c2
    for di in range(3):
        for e in range(2):
            for qq in range(2):
                for dj in range(3):
                    j1 = 2 * qq + e + dj
                    for ch in range(C1):
                        p[C_OFF + 56 * di + j1 * C1 + ch,
                          e * 2 * C2 + qq * C2: e * 2 * C2 + (qq + 1) * C2] = w2[:, ch, di, dj]
    p[B2_ROW, 0:2 * C2] = np.tile(b2, 2)

    # fc1 rows reordered: block pp (32 rows), row qq*16+c2  <-  NCHW flat feature c2*4+pp*2+qq
    for pp in range(2):
        for qq in range(2):
            for ch in range(C2):
                p[FW1_OFF + pp * 2 * C2 + qq * C2 + ch, :] = fw1[ch * 4 + pp * 2 + qq, :]
    p[FB1_ROW, :] = fb1

    # fc2 zero-padded to a lane-dense 128-wide output
    p[FW2_OFF:FW2_OFF + HID, 0:out_size] = fw2
    p[FB2_ROW, 0:out_size] = fb2
    return jnp.asarray(p)


# ---------------- wrapper: single pallas_call, batch as a parallel grid axis ----------------

def simple_cnn_forward(x_nchw, packed_params, out_size=1):
    n = x_nchw.shape[0]
    assert x_nchw.shape[1:] == (CIN, H, W), x_nchw.shape
    x = x_nchw.reshape(n, H, W)                 # Cin=1: NCHW -> (N,H,W), pure reshape
    out = pl.pallas_call(
        fused_cnn_kernel,
        out_shape=jax.ShapeDtypeStruct((n, 1, OUT_PAD), jnp.float32),
        grid=(n,),
        in_specs=[pl.BlockSpec((None, H, W), lambda i: (i, 0, 0)),
                  pl.BlockSpec((PROWS, 128), lambda i: (0, 0))],     # constants stay resident
        out_specs=pl.BlockSpec((None, 1, OUT_PAD), lambda i: (i, 0, 0)),
        compiler_params=pltpu.CompilerParams(dimension_semantics=("parallel",)),
    )(x, packed_params)
    return out.reshape(n, OUT_PAD)[:, :out_size]


# ---------------- pure-JAX reference for verification ----------------

def reference_forward(x_nchw, params):
    w1, b1, w2, b2, fw1, fb1, fw2, fb2 = params

    def block(x, w, b):
        y = jax.lax.conv_general_dilated(
            x, w, (1, 1), "VALID", dimension_numbers=("NCHW", "OIHW", "NCHW"))
        y = jnp.maximum(y + b[None, :, None, None], 0.0)
        return jax.lax.reduce_window(
            y, -jnp.inf, jax.lax.max, (1, 1, 2, 2), (1, 1, 2, 2), "VALID")

    y = block(x_nchw, w1, b1)
    y = block(y, w2, b2)
    y = y.reshape(y.shape[0], -1)
    y = jnp.maximum(y @ fw1 + fb1, 0.0)
    return y @ fw2 + fb2


if __name__ == "__main__":
    key = jax.random.PRNGKey(0)
    ks = jax.random.split(key, 9)

    x = jax.random.normal(ks[0], (2, 1, 16, 16), jnp.float32)

    params = (
        jax.random.normal(ks[1], (8, 1, 3, 3), jnp.float32) * 0.2,    # conv1 w
        jax.random.normal(ks[2], (8,), jnp.float32) * 0.1,            # conv1 b
        jax.random.normal(ks[3], (16, 8, 3, 3), jnp.float32) * 0.1,   # conv2 w
        jax.random.normal(ks[4], (16,), jnp.float32) * 0.1,           # conv2 b
        jax.random.normal(ks[5], (64, 128), jnp.float32) * 0.1,       # fc1 w (in, out)
        jax.random.normal(ks[6], (128,), jnp.float32) * 0.1,          # fc1 b
        jax.random.normal(ks[7], (128, 1), jnp.float32) * 0.1,        # fc2 w (in, out)
        jax.random.normal(ks[8], (1,), jnp.float32) * 0.1,            # fc2 b
    )

    kparams = prepare_params(params)                     # one-time, batch-independent

    out = jax.block_until_ready(jax.jit(simple_cnn_forward)(x, kparams))
    ref = jax.block_until_ready(reference_forward(x, params))

    assert out.shape == (2, 1), out.shape
    assert jnp.allclose(out, ref, rtol=1e-4, atol=1e-4), (out, ref)
    print("KERNEL_OK")
</pallas_src>

<mosaic_0001>
module attributes {stable_mosaic.version = 11 : i64} {
  func.func @fused_cnn_kernel(%arg0: i32, %arg1: memref<1x16x16xf32, #tpu.memory_space<vmem>>, %arg2: memref<440x128xf32, #tpu.memory_space<vmem>>, %arg3: memref<1x1x128xf32, #tpu.memory_space<vmem>>) attributes {dimension_semantics = [#tpu.dimension_semantics<parallel>], iteration_bounds = array<i64: 2>, scalar_prefetch = 0 : i64, scratch_operands = 0 : i64, tpu.core_type = #tpu.core_type<tc>, window_params = [{transform_indices = @transform_0, window_bounds = array<i64: 1, 16, 16>}, {pipeline_mode = #tpu.pipeline_mode<synchronous>, transform_indices = @transform_1, window_bounds = array<i64: 440, 128>}, {transform_indices = @transform_2, window_bounds = array<i64: 1, 1, 128>}]} {
    %c0 = arith.constant 0 : index
    %c0_0 = arith.constant 0 : index
    %c0_1 = arith.constant 0 : index
    %0 = tpu.strided_load %arg1[%c0, %c0_0, %c0_1] {strides = array<i32: 1, 2, 1>} : memref<1x16x16xf32, #tpu.memory_space<vmem>>, vector<1x7x16xf32>
    %1 = vector.shape_cast %0 : vector<1x7x16xf32> to vector<7x16xf32>
    %c0_2 = arith.constant 0 : index
    %c0_3 = arith.constant 0 : index
    %2 = vector.load %arg2[%c0_2, %c0_3] : memref<440x128xf32, #tpu.memory_space<vmem>>, vector<16x112xf32>
    %cst = arith.constant dense<0.000000e+00> : vector<7x112xf32>
    %3 = tpu.matmul %1, %2, %cst {dimension_numbers = #tpu.dot_dimension_numbers<[1], [0], [0], [1], [0, 0, 1, 1], [], []>} : vector<7x16xf32>, vector<16x112xf32>, vector<7x112xf32> -> vector<7x112xf32>
    %c0_4 = arith.constant 0 : index
    %c1 = arith.constant 1 : index
    %c0_5 = arith.constant 0 : index
    %4 = tpu.strided_load %arg1[%c0_4, %c1, %c0_5] {strides = array<i32: 1, 2, 1>} : memref<1x16x16xf32, #tpu.memory_space<vmem>>, vector<1x7x16xf32>
    %5 = vector.shape_cast %4 : vector<1x7x16xf32> to vector<7x16xf32>
    %c16 = arith.constant 16 : index
    %c0_6 = arith.constant 0 : index
    %6 = vector.load %arg2[%c16, %c0_6] : memref<440x128xf32, #tpu.memory_space<vmem>>, vector<16x112xf32>
    %cst_7 = arith.constant dense<0.000000e+00> : vector<7x112xf32>
    %7 = tpu.matmul %5, %6, %cst_7 {dimension_numbers = #tpu.dot_dimension_numbers<[1], [0], [0], [1], [0, 0, 1, 1], [], []>} : vector<7x16xf32>, vector<16x112xf32>, vector<7x112xf32> -> vector<7x112xf32>
    %8 = arith.addf %3, %7 : vector<7x112xf32>
    %c0_8 = arith.constant 0 : index
    %c2 = arith.constant 2 : index
    %c0_9 = arith.constant 0 : index
    %9 = tpu.strided_load %arg1[%c0_8, %c2, %c0_9] {strides = array<i32: 1, 2, 1>} : memref<1x16x16xf32, #tpu.memory_space<vmem>>, vector<1x7x16xf32>
    %10 = vector.shape_cast %9 : vector<1x7x16xf32> to vector<7x16xf32>
    %c32 = arith.constant 32 : index
    %c0_10 = arith.constant 0 : index
    %11 = vector.load %arg2[%c32, %c0_10] : memref<440x128xf32, #tpu.memory_space<vmem>>, vector<16x112xf32>
    %cst_11 = arith.constant dense<0.000000e+00> : vector<7x112xf32>
    %12 = tpu.matmul %10, %11, %cst_11 {dimension_numbers = #tpu.dot_dimension_numbers<[1], [0], [0], [1], [0, 0, 1, 1], [], []>} : vector<7x16xf32>, vector<16x112xf32>, vector<7x112xf32> -> vector<7x112xf32>
    %13 = arith.addf %8, %12 : vector<7x112xf32>
    %c0_12 = arith.constant 0 : index
    %c1_13 = arith.constant 1 : index
    %c0_14 = arith.constant 0 : index
    %14 = tpu.strided_load %arg1[%c0_12, %c1_13, %c0_14] {strides = array<i32: 1, 2, 1>} : memref<1x16x16xf32, #tpu.memory_space<vmem>>, vector<1x7x16xf32>
    %15 = vector.shape_cast %14 : vector<1x7x16xf32> to vector<7x16xf32>
    %c0_15 = arith.constant 0 : index
    %c0_16 = arith.constant 0 : index
    %16 = vector.load %arg2[%c0_15, %c0_16] : memref<440x128xf32, #tpu.memory_space<vmem>>, vector<16x112xf32>
    %cst_17 = arith.constant dense<0.000000e+00> : vector<7x112xf32>
    %17 = tpu.matmul %15, %16, %cst_17 {dimension_numbers = #tpu.dot_dimension_numbers<[1], [0], [0], [1], [0, 0, 1, 1], [], []>} : vector<7x16xf32>, vector<16x112xf32>, vector<7x112xf32> -> vector<7x112xf32>
    %c0_18 = arith.constant 0 : index
    %c2_19 = arith.constant 2 : index
    %c0_20 = arith.constant 0 : index
    %18 = tpu.strided_load %arg1[%c0_18, %c2_19, %c0_20] {strides = array<i32: 1, 2, 1>} : memref<1x16x16xf32, #tpu.memory_space<vmem>>, vector<1x7x16xf32>
    %19 = vector.shape_cast %18 : vector<1x7x16xf32> to vector<7x16xf32>
    %c16_21 = arith.constant 16 : index
    %c0_22 = arith.constant 0 : index
    %20 = vector.load %arg2[%c16_21, %c0_22] : memref<440x128xf32, #tpu.memory_space<vmem>>, vector<16x112xf32>
    %cst_23 = arith.constant dense<0.000000e+00> : vector<7x112xf32>
    %21 = tpu.matmul %19, %20, %cst_23 {dimension_numbers = #tpu.dot_dimension_numbers<[1], [0], [0], [1], [0, 0, 1, 1], [], []>} : vector<7x16xf32>, vector<16x112xf32>, vector<7x112xf32> -> vector<7x112xf32>
    %22 = arith.addf %17, %21 : vector<7x112xf32>
    %c0_24 = arith.constant 0 : index
    %c3 = arith.constant 3 : index
    %c0_25 = arith.constant 0 : index
    %23 = tpu.strided_load %arg1[%c0_24, %c3, %c0_25] {strides = array<i32: 1, 2, 1>} : memref<1x16x16xf32, #tpu.memory_space<vmem>>, vector<1x7x16xf32>
    %24 = vector.shape_cast %23 : vector<1x7x16xf32> to vector<7x16xf32>
    %c32_26 = arith.constant 32 : index
    %c0_27 = arith.constant 0 : index
    %25 = vector.load %arg2[%c32_26, %c0_27] : memref<440x128xf32, #tpu.memory_space<vmem>>, vector<16x112xf32>
    %cst_28 = arith.constant dense<0.000000e+00> : vector<7x112xf32>
    %26 = tpu.matmul %24, %25, %cst_28 {dimension_numbers = #tpu.dot_dimension_numbers<[1], [0], [0], [1], [0, 0, 1, 1], [], []>} : vector<7x16xf32>, vector<16x112xf32>, vector<7x112xf32> -> vector<7x112xf32>
    %27 = arith.addf %22, %26 : vector<7x112xf32>
    %28 = arith.maximumf %13, %27 : vector<7x112xf32>
    %29 = vector.extract_strided_slice %28 {offsets = [0, 0], sizes = [7, 56], strides = [1, 1]} : vector<7x112xf32> to vector<7x56xf32>
    %30 = vector.extract_strided_slice %28 {offsets = [0, 56], sizes = [7, 56], strides = [1, 1]} : vector<7x112xf32> to vector<7x56xf32>
    %31 = arith.maximumf %29, %30 : vector<7x56xf32>
    %c408 = arith.constant 408 : index
    %c0_29 = arith.constant 0 : index
    %32 = vector.load %arg2[%c408, %c0_29] : memref<440x128xf32, #tpu.memory_space<vmem>>, vector<1x56xf32>
    %33 = vector.broadcast %32 : vector<1x56xf32> to vector<7x56xf32>
    %34 = arith.addf %31, %33 : vector<7x56xf32>
    %cst_30 = arith.constant 0.000000e+00 : f32
    %35 = vector.broadcast %cst_30 : f32 to vector<7x56xf32>
    %36 = arith.maximumf %34, %35 : vector<7x56xf32>
    %c48 = arith.constant 48 : index
    %c0_31 = arith.constant 0 : index
    %37 = vector.load %arg2[%c48, %c0_31] : memref<440x128xf32, #tpu.memory_space<vmem>>, vector<56x64xf32>
    %38 = vector.extract_strided_slice %36 {offsets = [0, 0], sizes = [4, 56], strides = [1, 1]} : vector<7x56xf32> to vector<4x56xf32>
    %cst_32 = arith.constant dense<0.000000e+00> : vector<4x64xf32>
    %39 = tpu.matmul %38, %37, %cst_32 {dimension_numbers = #tpu.dot_dimension_numbers<[1], [0], [0], [1], [0, 0, 1, 1], [], []>} : vector<4x56xf32>, vector<56x64xf32>, vector<4x64xf32> -> vector<4x64xf32>
    %c104 = arith.constant 104 : index
    %c0_33 = arith.constant 0 : index
    %40 = vector.load %arg2[%c104, %c0_33] : memref<440x128xf32, #tpu.memory_space<vmem>>, vector<56x64xf32>
    %41 = vector.extract_strided_slice %36 {offsets = [1, 0], sizes = [4, 56], strides = [1, 1]} : vector<7x56xf32> to vector<4x56xf32>
    %cst_34 = arith.constant dense<0.000000e+00> : vector<4x64xf32>
    %42 = tpu.matmul %41, %40, %cst_34 {dimension_numbers = #tpu.dot_dimension_numbers<[1], [0], [0], [1], [0, 0, 1, 1], [], []>} : vector<4x56xf32>, vector<56x64xf32>, vector<4x64xf32> -> vector<4x64xf32>
    %43 = arith.addf %39, %42 : vector<4x64xf32>
    %c160 = arith.constant 160 : index
    %c0_35 = arith.constant 0 : index
    %44 = vector.load %arg2[%c160, %c0_35] : memref<440x128xf32, #tpu.memory_space<vmem>>, vector<56x64xf32>
    %45 = vector.extract_strided_slice %36 {offsets = [2, 0], sizes = [4, 56], strides = [1, 1]} : vector<7x56xf32> to vector<4x56xf32>
    %cst_36 = arith.constant dense<0.000000e+00> : vector<4x64xf32>
    %46 = tpu.matmul %45, %44, %cst_36 {dimension_numbers = #tpu.dot_dimension_numbers<[1], [0], [0], [1], [0, 0, 1, 1], [], []>} : vector<4x56xf32>, vector<56x64xf32>, vector<4x64xf32> -> vector<4x64xf32>
    %47 = arith.addf %43, %46 : vector<4x64xf32>
    %48 = vector.extract_strided_slice %47 {offsets = [0, 0], sizes = [1, 64], strides = [1, 1]} : vector<4x64xf32> to vector<1x64xf32>
    %49 = vector.extract_strided_slice %47 {offsets = [1, 0], sizes = [1, 64], strides = [1, 1]} : vector<4x64xf32> to vector<1x64xf32>
    %50 = arith.maximumf %48, %49 : vector<1x64xf32>
    %51 = vector.extract_strided_slice %47 {offsets = [2, 0], sizes = [1, 64], strides = [1, 1]} : vector<4x64xf32> to vector<1x64xf32>
    %52 = vector.extract_strided_slice %47 {offsets = [3, 0], sizes = [1, 64], strides = [1, 1]} : vector<4x64xf32> to vector<1x64xf32>
    %53 = arith.maximumf %51, %52 : vector<1x64xf32>
    %54 = tpu.concatenate %50, %53 in 0 : vector<1x64xf32>, vector<1x64xf32> -> vector<2x64xf32>
    %55 = vector.extract_strided_slice %54 {offsets = [0, 0], sizes = [2, 32], strides = [1, 1]} : vector<2x64xf32> to vector<2x32xf32>
    %56 = vector.extract_strided_slice %54 {offsets = [0, 32], sizes = [2, 32], strides = [1, 1]} : vector<2x64xf32> to vector<2x32xf32>
    %57 = arith.maximumf %55, %56 : vector<2x32xf32>
    %c416 = arith.constant 416 : index
    %c0_37 = arith.constant 0 : index
    %58 = vector.load %arg2[%c416, %c0_37] : memref<440x128xf32, #tpu.memory_space<vmem>>, vector<1x32xf32>
    %59 = vector.broadcast %58 : vector<1x32xf32> to vector<2x32xf32>
    %60 = arith.addf %57, %59 : vector<2x32xf32>
    %cst_38 = arith.constant 0.000000e+00 : f32
    %61 = vector.broadcast %cst_38 : f32 to vector<2x32xf32>
    %62 = arith.maximumf %60, %61 : vector<2x32xf32>
    %63 = vector.extract_strided_slice %62 {offsets = [0, 0], sizes = [1, 32], strides = [1, 1]} : vector<2x32xf32> to vector<1x32xf32>
    %c216 = arith.constant 216 : index
    %c0_39 = arith.constant 0 : index
    %64 = vector.load %arg2[%c216, %c0_39] : memref<440x128xf32, #tpu.memory_space<vmem>>, vector<32x128xf32>
    %cst_40 = arith.constant dense<0.000000e+00> : vector<1x128xf32>
    %65 = tpu.matmul %63, %64, %cst_40 {dimension_numbers = #tpu.dot_dimension_numbers<[1], [0], [0], [1], [0, 0, 1, 1], [], []>} : vector<1x32xf32>, vector<32x128xf32>, vector<1x128xf32> -> vector<1x128xf32>
    %66 = vector.extract_strided_slice %62 {offsets = [1, 0], sizes = [1, 32], strides = [1, 1]} : vector<2x32xf32> to vector<1x32xf32>
    %c248 = arith.constant 248 : index
    %c0_41 = arith.constant 0 : index
    %67 = vector.load %arg2[%c248, %c0_41] : memref<440x128xf32, #tpu.memory_space<vmem>>, vector<32x128xf32>
    %cst_42 = arith.constant dense<0.000000e+00> : vector<1x128xf32>
    %68 = tpu.matmul %66, %67, %cst_42 {dimension_numbers = #tpu.dot_dimension_numbers<[1], [0], [0], [1], [0, 0, 1, 1], [], []>} : vector<1x32xf32>, vector<32x128xf32>, vector<1x128xf32> -> vector<1x128xf32>
    %69 = arith.addf %65, %68 : vector<1x128xf32>
    %c424 = arith.constant 424 : index
    %c0_43 = arith.constant 0 : index
    %70 = vector.load %arg2[%c424, %c0_43] : memref<440x128xf32, #tpu.memory_space<vmem>>, vector<1x128xf32>
    %71 = arith.addf %69, %70 : vector<1x128xf32>
    %cst_44 = arith.constant 0.000000e+00 : f32
    %72 = vector.broadcast %cst_44 : f32 to vector<1x128xf32>
    %73 = arith.maximumf %71, %72 : vector<1x128xf32>
    %c280 = arith.constant 280 : index
    %c0_45 = arith.constant 0 : index
    %74 = vector.load %arg2[%c280, %c0_45] : memref<440x128xf32, #tpu.memory_space<vmem>>, vector<128x128xf32>
    %cst_46 = arith.constant dense<0.000000e+00> : vector<1x128xf32>
    %75 = tpu.matmul %73, %74, %cst_46 {dimension_numbers = #tpu.dot_dimension_numbers<[1], [0], [0], [1], [0, 0, 1, 1], [], []>} : vector<1x128xf32>, vector<128x128xf32>, vector<1x128xf32> -> vector<1x128xf32>
    %c432 = arith.constant 432 : index
    %c0_47 = arith.constant 0 : index
    %76 = vector.load %arg2[%c432, %c0_47] : memref<440x128xf32, #tpu.memory_space<vmem>>, vector<1x128xf32>
    %77 = arith.addf %75, %76 : vector<1x128xf32>
    %c0_48 = arith.constant 0 : index
    %c0_49 = arith.constant 0 : index
    %c0_50 = arith.constant 0 : index
    %78 = vector.load %arg3[%c0_48, %c0_49, %c0_50] : memref<1x1x128xf32, #tpu.memory_space<vmem>>, vector<1x1x128xf32>
    %79 = vector.shape_cast %78 : vector<1x1x128xf32> to vector<1x128xf32>
    %80 = vector.shape_cast %77 : vector<1x128xf32> to vector<1x1x128xf32>
    tpu.vector_store %arg3[%c0_48, %c0_49, %c0_50], %80 {strides = array<i32>} : memref<1x1x128xf32, #tpu.memory_space<vmem>>, vector<1x1x128xf32>,
    return
  }
  func.func @transform_0(%arg0: i32) -> (i32, i32, i32) {
    %c0_i32 = arith.constant 0 : i32
    %c0_i32_0 = arith.constant 0 : i32
    %c0_i32_1 = arith.constant 0 : i32
    return %arg0, %c0_i32, %c0_i32_0 : i32, i32, i32
  }
  func.func @transform_1(%arg0: i32) -> (i32, i32) {
    %c0_i32 = arith.constant 0 : i32
    %c0_i32_0 = arith.constant 0 : i32
    %c0_i32_1 = arith.constant 0 : i32
    return %c0_i32, %c0_i32_0 : i32, i32
  }
  func.func @transform_2(%arg0: i32) -> (i32, i32, i32) {
    %c0_i32 = arith.constant 0 : i32
    %c0_i32_0 = arith.constant 0 : i32
    %c0_i32_1 = arith.constant 0 : i32
    return %arg0, %c0_i32, %c0_i32_0 : i32, i32, i32
  }
}

</mosaic_0001>

<llo_original>
// kernel: simple_cnn_forward.1
$region0: #{simple_cnn_forward.1}
  #allocation0 [shape = 'u32[]', space=smem, size = 0x4, offset = 0x4, fixed_abs, tag = 'smem constant byte address 0x4 - core index']
  #allocation1 [shape = 'u32[144,128]{1,0:T(1,128)}', space=vmem, size = 0x12000, scoped, tag = 'internal scratch']
  %s0 = inlined_call_operand.hbm [shape: f32[2,16,16], index: 0, kind: input, shape index: {}]
  %s1 = inlined_call_operand.hbm [shape: f32[440,128], index: 1, kind: input, shape index: {}]
  %s2 = inlined_call_operand.vmem [shape: f32[2,1,128], index: 2, kind: output, shape index: {}]
  %s3 = sld [smem:[#allocation0]]
  $region49: #{simple_cnn_forward.1} parent=0
    _
  %s5 = ssub.s32 1, %s3
  %s6 = scalar_select 0, %s5, %s3
  $region1: #{simple_cnn_forward.1} parent=0
    #allocation2 [shape = 'u8[16384]{0}', space=vmem, size = 0x4000, scoped, tag = 'input window, operand 0']
    #allocation3 [shape = 's32[2]{0}', space=sflag, size = 0x8, scoped, tag = 'scoped memory for simple_cnn_forward.1']
    #allocation4 [shape = 'u8[225280]{0}', space=vmem, size = 0x37000, scoped, tag = 'input window, operand 1, single buffered']
    #allocation5 [shape = 's32[1]{0}', space=sflag, size = 0x4, scoped, tag = 'scoped memory for simple_cnn_forward.1']
    %7 = vsyncpa [#allocation3], 0
    %s8 = scalar_lea.sflag [#allocation3], 1
    %9 = vsyncpa %s8, 0
    %10 = vsyncpa [#allocation5], 0
    loop: start=0, step=1, limit=4
    $region2: #{simple_cnn_forward.1} parent=1 // loop_pre_header
      _
    $region3: #{simple_cnn_forward.1} parent=1 // loop_header
      %s12 = sphi 0, %s16
      %p13 = scmp.ge.s32.totalorder %s12, 4
      %s22 = sphi 0, %s24
      %s25 = sphi 0, %s22
      %s26 = sphi 0, %s25
      %s42 = sphi 0, %s26
      %s46 = sphi 0, %s46
      %s48 = sphi 0, %s46
      %s49 = sphi 0, %s48
      %s63 = sphi 0, %s49
      %s69 = sphi 0, %s71
      %s72 = sphi 0, %s69
      %s73 = sphi 0, %s72
      %s89 = sphi 0, %s73
    $region4: #{simple_cnn_forward.1} parent=1 // loop_header_branch
      %15 = sbr.rel (%p13) target = $region8
    $region5: #{simple_cnn_forward.1} parent=1 // loop_body
      %s17 = ssub.s32 %s12, 1
      %s18 = ssub.s32 %s12, 2
      %s19 = sadd.s32 %s12, 1
      %s20 = ssub.s32 %s12, %s19
      %p21 = scmp.eq.s32.totalorder %s20, 0
      %s23 = sadd.s32 %s22, 1
      %s24 = scalar_select %p21, %s22, %s23
      %p27 = pneg %p21
      %p28 = scmp.eq.s32.totalorder %s12, 1
      %p29 = por %p27, %p28
      %p30 = scmp.ne.s32.totalorder %s22, %s25
      %p31 = scmp.eq.s32.totalorder %s12, 0
      %p32 = por %p30, %p31
      %p33 = scmp.ne.s32.totalorder %s22, %s25
      %p34 = scmp.eq.s32.totalorder %s17, 1
      %p35 = por %p33, %p34
      %p36 = scmp.ne.s32.totalorder %s25, %s26
      %p37 = scmp.eq.s32.totalorder %s17, 0
      %p38 = por %p36, %p37
      %p39 = scmp.ne.s32.totalorder %s25, %s26
      %p40 = scmp.eq.s32.totalorder %s18, 1
      %p41 = por %p39, %p40
      %p43 = scmp.ne.s32.totalorder %s26, %s42
      %p44 = scmp.eq.s32.totalorder %s18, 0
      %p45 = por %p43, %p44
      %s47 = sadd.s32 %s46, 1
      %p50 = scmp.eq.s32.totalorder %s12, 1
      %p51 = scmp.ne.s32.totalorder %s46, %s48
      %p52 = scmp.eq.s32.totalorder %s12, 0
      %p53 = por %p51, %p52
      %p54 = scmp.ne.s32.totalorder %s46, %s48
      %p55 = scmp.eq.s32.totalorder %s17, 1
      %p56 = por %p54, %p55
      %p57 = scmp.ne.s32.totalorder %s48, %s49
      %p58 = scmp.eq.s32.totalorder %s17, 0
      %p59 = por %p57, %p58
      %p60 = scmp.ne.s32.totalorder %s48, %s49
      %p61 = scmp.eq.s32.totalorder %s18, 1
      %p62 = por %p60, %p61
      %p64 = scmp.ne.s32.totalorder %s49, %s63
      %p65 = scmp.eq.s32.totalorder %s18, 0
      %p66 = por %p64, %p65
      %s67 = ssub.s32 %s12, %s19
      %p68 = scmp.eq.s32.totalorder %s67, 0
      %s70 = sadd.s32 %s69, 1
      %s71 = scalar_select %p68, %s69, %s70
      %p74 = pneg %p68
      %p75 = scmp.eq.s32.totalorder %s12, 1
      %p76 = por %p74, %p75
      %p77 = scmp.ne.s32.totalorder %s69, %s72
      %p78 = scmp.eq.s32.totalorder %s12, 0
      %p79 = por %p77, %p78
      %p80 = scmp.ne.s32.totalorder %s69, %s72
      %p81 = scmp.eq.s32.totalorder %s17, 1
      %p82 = por %p80, %p81
      %p83 = scmp.ne.s32.totalorder %s72, %s73
      %p84 = scmp.eq.s32.totalorder %s17, 0
      %p85 = por %p83, %p84
      %p86 = scmp.ne.s32.totalorder %s72, %s73
      %p87 = scmp.eq.s32.totalorder %s18, 1
      %p88 = por %p86, %p87
      %p90 = scmp.ne.s32.totalorder %s73, %s89
      %p91 = scmp.eq.s32.totalorder %s18, 0
      %p92 = por %p90, %p91
      %p93 = scmp.le.s32.totalorder 1, %s12
      %p94 = scmp.lt.s32.totalorder %s12, 3
      %p95 = pnand %p93, %p94
      %p96 = pneg %p95
      // Predicated region
      $region9: #{simple_cnn_forward.1} parent=5 // pred_check
        _
      $region10: #{simple_cnn_forward.1} parent=5 // pred_check_branch
        %98 = sbr.rel (%p95) target = $region12
      $region11: #{simple_cnn_forward.1} parent=5 // pred_region
        %s99 = ssub.s32 %s12, 1
        // Predicated region
        $region13: #{simple_cnn_forward.1} parent=11 // pred_check
          %p100 = pneg %p59
        $region14: #{simple_cnn_forward.1} parent=11 // pred_check_branch
          %102 = sbr.rel (%p100) target = $region16
        $region15: #{simple_cnn_forward.1} parent=11 // pred_region
          %s104 = ssub.s32 7040, 7040
          %105 = vsyncadd [#allocation5], %s104
          %s106 = sshll.u32 [#allocation4], 4
          %s107 = int_to_ptr.vmem [resolvable:$true] %s106
          %112 = dma.hbm_to_vmem [thread:$0]  %s1, 7040, %s107, [#allocation5], 128, 128, 8
        $region16: #{simple_cnn_forward.1} parent=11 // pred_fallthru
          _
      $region12: #{simple_cnn_forward.1} parent=5 // pred_fallthru
        _
      %p113 = scmp.lt.s32.totalorder %s12, 2
      // Predicated region
      $region17: #{simple_cnn_forward.1} parent=5 // pred_check
        %p114 = pneg %p113
      $region18: #{simple_cnn_forward.1} parent=5 // pred_check_branch
        %116 = sbr.rel (%p114) target = $region20
      $region19: #{simple_cnn_forward.1} parent=5 // pred_region
        // Predicated region
        $region21: #{simple_cnn_forward.1} parent=19 // pred_check
          %p117 = pneg %p32
        $region22: #{simple_cnn_forward.1} parent=19 // pred_check_branch
          %119 = sbr.rel (%p117) target = $region24
        $region23: #{simple_cnn_forward.1} parent=19 // pred_region
          %s120 = sand.u32 %s22, 1
          %s121 = scalar_lea.sflag [#allocation3], %s120
          %s122 = sand.u32 %s22, 1
          %s123 = smul.addr %s122, 16
          %s124 = scalar_lea.vmem [#allocation2], %s123
          %s126 = ssub.s32 256, 256
          %127 = vsyncadd %s121, %s126
          %s128 = smul.addr %s12, 2
          %s129 = smul.addr %s128, 128
          %s130 = scalar_lea.hbm %s0, %s129
          %s131 = sshll.u32 %s124, 4
          %s132 = int_to_ptr.vmem [resolvable:$true] %s131
          %137 = dma.hbm_to_vmem [thread:$0]  %s130, 256, %s132, %s121, 128, 128, 8
        $region24: #{simple_cnn_forward.1} parent=19 // pred_fallthru
          _
      $region20: #{simple_cnn_forward.1} parent=5 // pred_fallthru
        _
      %p138 = scmp.le.s32.totalorder 1, %s12
      %p139 = scmp.lt.s32.totalorder %s12, 3
      %p140 = pnand %p138, %p139
      %p141 = pneg %p140
      // Predicated region
      $region25: #{simple_cnn_forward.1} parent=5 // pred_check
        _
      $region26: #{simple_cnn_forward.1} parent=5 // pred_check_branch
        %143 = sbr.rel (%p140) target = $region28
      $region27: #{simple_cnn_forward.1} parent=5 // pred_region
        %s144 = ssub.s32 %s12, 1
        %s145 = sand.u32 %s25, 1
        %s146 = scalar_lea.sflag [#allocation3], %s145
        %s147 = sand.u32 %s25, 1
        %s148 = smul.addr %s147, 16
        %s149 = scalar_lea.vmem [#allocation2], %s148
        // Predicated region
        $region29: #{simple_cnn_forward.1} parent=27 // pred_check
          %p150 = pneg %p38
        $region30: #{simple_cnn_forward.1} parent=27 // pred_check_branch
          %152 = sbr.rel (%p150) target = $region32
        $region31: #{simple_cnn_forward.1} parent=27 // pred_region
          %153 = dma.done %s146, 256
        $region32: #{simple_cnn_forward.1} parent=27 // pred_fallthru
          _
        // Predicated region
        $region33: #{simple_cnn_forward.1} parent=27 // pred_check
          %p154 = pneg %p59
        $region34: #{simple_cnn_forward.1} parent=27 // pred_check_branch
          %156 = sbr.rel (%p154) target = $region36
        $region35: #{simple_cnn_forward.1} parent=27 // pred_region
          %157 = dma.done [#allocation5], 7040
        $region36: #{simple_cnn_forward.1} parent=27 // pred_fallthru
          _
        %s158 = sand.u32 %s25, 1
        %s159 = scalar_lea.sflag [#allocation3], %s158
        %s160 = sand.u32 %s25, 1
        %s161 = smul.addr %s160, 16
        %s162 = scalar_lea.vmem [#allocation2], %s161
        %p163 = pneg %p38
        %p164 = pneg %p35
        %p165 = pneg %p59
        %p166 = pneg %p56
        %p167 = pneg %p85
        %p168 = pneg %p82
        %p169 = scmp.lt.s32.totalorder %s17, 1
        %s170 = scalar_select %p169, %s17, 1
        %s171 = scalar_lea.vmem %s2, %s170
        %p172 = scmp.lt.s32.totalorder %s17, 1
        %s173 = scalar_select %p172, %s17, 1
        %s174 = scalar_lea.vmem %s2, %s173
        %v175 = vld [vmem:[%s149] ss:$2 sm:$0x7f]
        %v176 = vld [vmem:[#allocation4] sm:$0xff]
        %v177 = vld [vmem:[#allocation4 + $0x8] sm:$0xff]
        %s178 = scalar_lea.vmem %s149, 1 [#allocation2]
        %v179 = vld [vmem:[%s178] ss:$2 sm:$0x7f]
        %v180 = vld [vmem:[#allocation4 + $0x10] sm:$0xff]
        %v181 = vld [vmem:[#allocation4 + $0x18] sm:$0xff]
        %vm182 = vcmask 130048
        %v184 = vsel %vm182, %v179, 0
        %186 = vmatprep.subr.mxu0 0.0
        %187 = vmatpush1.msra.mxu0 %v180
        %188 = vmatprep.subr.mxu0 0.0
        %189 = vmatpush1.msra.mxu0 %v181
        %190 = vmatprep.subr.mxu0 0.0
        %191 = vmatpush1.msra.mxu0 0.0
        %192 = vmatprep.subr.mxu0 0.0
        %193 = vmatpush1.msra.mxu0 0.0
        %194 = vmatprep.subr.mxu0 0.0
        %195 = vmatpush1.msra.mxu0 0.0
        %196 = vmatprep.subr.mxu0 0.0
        %197 = vmatpush1.msra.mxu0 0.0
        %198 = vmatprep.subr.mxu0 0.0
        %199 = vmatpush1.msra.mxu0 0.0
        %200 = vmatprep.subr.mxu0 0.0
        %201 = vmatpush1.msra.mxu0 0.0
        %202 = vmatprep.subr.mxu0 0.0
        %203 = vmatpush1.msra.mxu0 0.0
        %204 = vmatprep.subr.mxu0 0.0
        %205 = vmatpush1.msra.mxu0 0.0
        %206 = vmatprep.subr.mxu0 0.0
        %207 = vmatpush1.msra.mxu0 0.0
        %208 = vmatprep.subr.mxu0 0.0
        %209 = vmatpush1.msra.mxu0 0.0
        %210 = vmatprep.subr.mxu0 0.0
        %211 = vmatpush1.msra.mxu0 0.0
        %212 = vmatprep.subr.mxu0 0.0
        %213 = vmatpush1.msra.mxu0 0.0
        %214 = vmatprep.subr.mxu0 0.0
        %215 = vmatpush1.msra.mxu0 0.0
        %216 = vmatprep.subr.mxu0 0.0
        %217 = vmatpush1.msra.mxu0 0.0
        %218 = vmatprep.subr.mxu0 0.0
        %219 = vmatpush1.msra.mxu0 0.0
        %220 = vmatprep.subr.mxu0 0.0
        %221 = vmatpush1.msra.mxu0 0.0
        %222 = vmatprep.subr.mxu0 0.0
        %223 = vmatpush1.msra.mxu0 0.0
        %224 = vmatprep.subr.mxu0 0.0
        %225 = vmatpush1.msra.mxu0 0.0
        %226 = vmatprep.subr.mxu0 0.0
        %227 = vmatpush1.msra.mxu0 0.0
        %228 = vmatprep.subr.mxu0 0.0
        %229 = vmatpush1.msra.mxu0 0.0
        %230 = vmatprep.subr.mxu0 0.0
        %231 = vmatpush1.msra.mxu0 0.0
        %232 = vmatprep.subr.mxu0 0.0
        %233 = vmatpush1.msra.mxu0 0.0
        %234 = vmatprep.subr.mxu0 0.0
        %235 = vmatpush1.msra.mxu0 0.0
        %236 = vmatprep.subr.mxu0 0.0
        %237 = vmatpush1.msra.mxu0 0.0
        %238 = vmatprep.subr.mxu0 0.0
        %239 = vmatpush1.msra.mxu0 0.0
        %240 = vmatprep.subr.mxu0 0.0
        %241 = vmatpush1.msra.mxu0 0.0
        %242 = vmatprep.subr.mxu0 0.0
        %243 = vmatpush1.msra.mxu0 0.0
        %244 = vmatprep.subr.mxu0 0.0
        %245 = vmatpush1.msra.mxu0 0.0
        %246 = vmatprep.subr.mxu0 0.0
        %247 = vmatpush1.msra.mxu0 0.0
        %248 = vmatprep.subr.mxu0 0.0
        %249 = vmatpush1.msra.mxu0 0.0
        %250 = vmatprep.mubr.f32.mxu0 0.0
        %251 = vmatmul.mubr.f32.gmra.mrb[0].mxu0 %v184
        %v252 = vpop.f32.mrb[0].mxu0
        %v253 = vadd.f32 0.0, %v252
        %v254 = vpop.f32.mrb[0].mxu0
        %255 = vdwg.mxu0
        %v257 = vsel %vm182, %v175, 0
        %259 = vmatprep.subr.mxu0 0.0
        %260 = vmatpush1.msra.mxu0 %v176
        %261 = vmatprep.subr.mxu0 0.0
        %262 = vmatpush1.msra.mxu0 %v177
        %263 = vmatprep.subr.mxu0 0.0
        %264 = vmatpush1.msra.mxu0 0.0
        %265 = vmatprep.subr.mxu0 0.0
        %266 = vmatpush1.msra.mxu0 0.0
        %267 = vmatprep.subr.mxu0 0.0
        %268 = vmatpush1.msra.mxu0 0.0
        %269 = vmatprep.subr.mxu0 0.0
        %270 = vmatpush1.msra.mxu0 0.0
        %271 = vmatprep.subr.mxu0 0.0
        %272 = vmatpush1.msra.mxu0 0.0
        %273 = vmatprep.subr.mxu0 0.0
        %274 = vmatpush1.msra.mxu0 0.0
        %275 = vmatprep.subr.mxu0 0.0
        %276 = vmatpush1.msra.mxu0 0.0
        %277 = vmatprep.subr.mxu0 0.0
        %278 = vmatpush1.msra.mxu0 0.0
        %279 = vmatprep.subr.mxu0 0.0
        %280 = vmatpush1.msra.mxu0 0.0
        %281 = vmatprep.subr.mxu0 0.0
        %282 = vmatpush1.msra.mxu0 0.0
        %283 = vmatprep.subr.mxu0 0.0
        %284 = vmatpush1.msra.mxu0 0.0
        %285 = vmatprep.subr.mxu0 0.0
        %286 = vmatpush1.msra.mxu0 0.0
        %287 = vmatprep.subr.mxu0 0.0
        %288 = vmatpush1.msra.mxu0 0.0
        %289 = vmatprep.subr.mxu0 0.0
        %290 = vmatpush1.msra.mxu0 0.0
        %291 = vmatprep.subr.mxu0 0.0
        %292 = vmatpush1.msra.mxu0 0.0
        %293 = vmatprep.subr.mxu0 0.0
        %294 = vmatpush1.msra.mxu0 0.0
        %295 = vmatprep.subr.mxu0 0.0
        %296 = vmatpush1.msra.mxu0 0.0
        %297 = vmatprep.subr.mxu0 0.0
        %298 = vmatpush1.msra.mxu0 0.0
        %299 = vmatprep.subr.mxu0 0.0
        %300 = vmatpush1.msra.mxu0 0.0
        %301 = vmatprep.subr.mxu0 0.0
        %302 = vmatpush1.msra.mxu0 0.0
        %303 = vmatprep.subr.mxu0 0.0
        %304 = vmatpush1.msra.mxu0 0.0
        %305 = vmatprep.subr.mxu0 0.0
        %306 = vmatpush1.msra.mxu0 0.0
        %307 = vmatprep.subr.mxu0 0.0
        %308 = vmatpush1.msra.mxu0 0.0
        %309 = vmatprep.subr.mxu0 0.0
        %310 = vmatpush1.msra.mxu0 0.0
        %311 = vmatprep.subr.mxu0 0.0
        %312 = vmatpush1.msra.mxu0 0.0
        %313 = vmatprep.subr.mxu0 0.0
        %314 = vmatpush1.msra.mxu0 0.0
        %315 = vmatprep.subr.mxu0 0.0
        %316 = vmatpush1.msra.mxu0 0.0
        %317 = vmatprep.subr.mxu0 0.0
        %318 = vmatpush1.msra.mxu0 0.0
        %319 = vmatprep.subr.mxu0 0.0
        %320 = vmatpush1.msra.mxu0 0.0
        %321 = vmatprep.subr.mxu0 0.0
        %322 = vmatpush1.msra.mxu0 0.0
        %323 = vmatprep.mubr.f32.mxu0 0.0
        %324 = vmatmul.mubr.f32.gmra.mrb[0].mxu0 %v257
        %v325 = vpop.f32.mrb[0].mxu0
        %v326 = vadd.f32 %v253, %v325
        %v327 = vpop.f32.mrb[0].mxu0
        %328 = vdwg.mxu0
        %s329 = scalar_lea.vmem %s149, 2 [#allocation2]
        %v330 = vld [vmem:[%s329] ss:$2 sm:$0x7f]
        %v331 = vld [vmem:[#allocation4 + $0x20] sm:$0xff]
        %v332 = vld [vmem:[#allocation4 + $0x28] sm:$0xff]
        %v334 = vsel %vm182, %v330, 0
        %336 = vmatprep.subr.mxu0 0.0
        %337 = vmatpush1.msra.mxu0 %v331
        %338 = vmatprep.subr.mxu0 0.0
        %339 = vmatpush1.msra.mxu0 %v332
        %340 = vmatprep.subr.mxu0 0.0
        %341 = vmatpush1.msra.mxu0 0.0
        %342 = vmatprep.subr.mxu0 0.0
        %343 = vmatpush1.msra.mxu0 0.0
        %344 = vmatprep.subr.mxu0 0.0
        %345 = vmatpush1.msra.mxu0 0.0
        %346 = vmatprep.subr.mxu0 0.0
        %347 = vmatpush1.msra.mxu0 0.0
        %348 = vmatprep.subr.mxu0 0.0
        %349 = vmatpush1.msra.mxu0 0.0
        %350 = vmatprep.subr.mxu0 0.0
        %351 = vmatpush1.msra.mxu0 0.0
        %352 = vmatprep.subr.mxu0 0.0
        %353 = vmatpush1.msra.mxu0 0.0
        %354 = vmatprep.subr.mxu0 0.0
        %355 = vmatpush1.msra.mxu0 0.0
        %356 = vmatprep.subr.mxu0 0.0
        %357 = vmatpush1.msra.mxu0 0.0
        %358 = vmatprep.subr.mxu0 0.0
        %359 = vmatpush1.msra.mxu0 0.0
        %360 = vmatprep.subr.mxu0 0.0
        %361 = vmatpush1.msra.mxu0 0.0
        %362 = vmatprep.subr.mxu0 0.0
        %363 = vmatpush1.msra.mxu0 0.0
        %364 = vmatprep.subr.mxu0 0.0
        %365 = vmatpush1.msra.mxu0 0.0
        %366 = vmatprep.subr.mxu0 0.0
        %367 = vmatpush1.msra.mxu0 0.0
        %368 = vmatprep.subr.mxu0 0.0
        %369 = vmatpush1.msra.mxu0 0.0
        %370 = vmatprep.subr.mxu0 0.0
        %371 = vmatpush1.msra.mxu0 0.0
        %372 = vmatprep.subr.mxu0 0.0
        %373 = vmatpush1.msra.mxu0 0.0
        %374 = vmatprep.subr.mxu0 0.0
        %375 = vmatpush1.msra.mxu0 0.0
        %376 = vmatprep.subr.mxu0 0.0
        %377 = vmatpush1.msra.mxu0 0.0
        %378 = vmatprep.subr.mxu0 0.0
        %379 = vmatpush1.msra.mxu0 0.0
        %380 = vmatprep.subr.mxu0 0.0
        %381 = vmatpush1.msra.mxu0 0.0
        %382 = vmatprep.subr.mxu0 0.0
        %383 = vmatpush1.msra.mxu0 0.0
        %384 = vmatprep.subr.mxu0 0.0
        %385 = vmatpush1.msra.mxu0 0.0
        %386 = vmatprep.subr.mxu0 0.0
        %387 = vmatpush1.msra.mxu0 0.0
        %388 = vmatprep.subr.mxu0 0.0
        %389 = vmatpush1.msra.mxu0 0.0
        %390 = vmatprep.subr.mxu0 0.0
        %391 = vmatpush1.msra.mxu0 0.0
        %392 = vmatprep.subr.mxu0 0.0
        %393 = vmatpush1.msra.mxu0 0.0
        %394 = vmatprep.subr.mxu0 0.0
        %395 = vmatpush1.msra.mxu0 0.0
        %396 = vmatprep.subr.mxu0 0.0
        %397 = vmatpush1.msra.mxu0 0.0
        %398 = vmatprep.subr.mxu0 0.0
        %399 = vmatpush1.msra.mxu0 0.0
        %400 = vmatprep.mubr.f32.mxu0 0.0
        %401 = vmatmul.mubr.f32.gmra.mrb[0].mxu0 %v334
        %v402 = vpop.f32.mrb[0].mxu0
        %v403 = vadd.f32 0.0, %v402
        %v404 = vpop.f32.mrb[0].mxu0
        %405 = vdwg.mxu0
        %v406 = vadd.f32 %v326, %v403
        %407 = vmatprep.subr.mxu0 0.0
        %408 = vmatpush1.msra.mxu0 %v180
        %409 = vmatprep.subr.mxu0 0.0
        %410 = vmatpush1.msra.mxu0 %v181
        %411 = vmatprep.subr.mxu0 0.0
        %412 = vmatpush1.msra.mxu0 0.0
        %413 = vmatprep.subr.mxu0 0.0
        %414 = vmatpush1.msra.mxu0 0.0
        %415 = vmatprep.subr.mxu0 0.0
        %416 = vmatpush1.msra.mxu0 0.0
        %417 = vmatprep.subr.mxu0 0.0
        %418 = vmatpush1.msra.mxu0 0.0
        %419 = vmatprep.subr.mxu0 0.0
        %420 = vmatpush1.msra.mxu0 0.0
        %421 = vmatprep.subr.mxu0 0.0
        %422 = vmatpush1.msra.mxu0 0.0
        %423 = vmatprep.subr.mxu0 0.0
        %424 = vmatpush1.msra.mxu0 0.0
        %425 = vmatprep.subr.mxu0 0.0
        %426 = vmatpush1.msra.mxu0 0.0
        %427 = vmatprep.subr.mxu0 0.0
        %428 = vmatpush1.msra.mxu0 0.0
        %429 = vmatprep.subr.mxu0 0.0
        %430 = vmatpush1.msra.mxu0 0.0
        %431 = vmatprep.subr.mxu0 0.0
        %432 = vmatpush1.msra.mxu0 0.0
        %433 = vmatprep.subr.mxu0 0.0
        %434 = vmatpush1.msra.mxu0 0.0
        %435 = vmatprep.subr.mxu0 0.0
        %436 = vmatpush1.msra.mxu0 0.0
        %437 = vmatprep.subr.mxu0 0.0
        %438 = vmatpush1.msra.mxu0 0.0
        %439 = vmatprep.subr.mxu0 0.0
        %440 = vmatpush1.msra.mxu0 0.0
        %441 = vmatprep.subr.mxu0 0.0
        %442 = vmatpush1.msra.mxu0 0.0
        %443 = vmatprep.subr.mxu0 0.0
        %444 = vmatpush1.msra.mxu0 0.0
        %445 = vmatprep.subr.mxu0 0.0
        %446 = vmatpush1.msra.mxu0 0.0
        %447 = vmatprep.subr.mxu0 0.0
        %448 = vmatpush1.msra.mxu0 0.0
        %449 = vmatprep.subr.mxu0 0.0
        %450 = vmatpush1.msra.mxu0 0.0
        %451 = vmatprep.subr.mxu0 0.0
        %452 = vmatpush1.msra.mxu0 0.0
        %453 = vmatprep.subr.mxu0 0.0
        %454 = vmatpush1.msra.mxu0 0.0
        %455 = vmatprep.subr.mxu0 0.0
        %456 = vmatpush1.msra.mxu0 0.0
        %457 = vmatprep.subr.mxu0 0.0
        %458 = vmatpush1.msra.mxu0 0.0
        %459 = vmatprep.subr.mxu0 0.0
        %460 = vmatpush1.msra.mxu0 0.0
        %461 = vmatprep.subr.mxu0 0.0
        %462 = vmatpush1.msra.mxu0 0.0
        %463 = vmatprep.subr.mxu0 0.0
        %464 = vmatpush1.msra.mxu0 0.0
        %465 = vmatprep.subr.mxu0 0.0
        %466 = vmatpush1.msra.mxu0 0.0
        %467 = vmatprep.subr.mxu0 0.0
        %468 = vmatpush1.msra.mxu0 0.0
        %469 = vmatprep.subr.mxu0 0.0
        %470 = vmatpush1.msra.mxu0 0.0
        %471 = vmatprep.mubr.f32.mxu0 0.0
        %472 = vmatmul.mubr.f32.gmra.mrb[0].mxu0 %v334
        %v473 = vpop.f32.mrb[0].mxu0
        %v474 = vadd.f32 0.0, %v473
        %v475 = vpop.f32.mrb[0].mxu0
        %476 = vdwg.mxu0
        %477 = vmatprep.subr.mxu0 0.0
        %478 = vmatpush1.msra.mxu0 %v176
        %479 = vmatprep.subr.mxu0 0.0
        %480 = vmatpush1.msra.mxu0 %v177
        %481 = vmatprep.subr.mxu0 0.0
        %482 = vmatpush1.msra.mxu0 0.0
        %483 = vmatprep.subr.mxu0 0.0
        %484 = vmatpush1.msra.mxu0 0.0
        %485 = vmatprep.subr.mxu0 0.0
        %486 = vmatpush1.msra.mxu0 0.0
        %487 = vmatprep.subr.mxu0 0.0
        %488 = vmatpush1.msra.mxu0 0.0
        %489 = vmatprep.subr.mxu0 0.0
        %490 = vmatpush1.msra.mxu0 0.0
        %491 = vmatprep.subr.mxu0 0.0
        %492 = vmatpush1.msra.mxu0 0.0
        %493 = vmatprep.subr.mxu0 0.0
        %494 = vmatpush1.msra.mxu0 0.0
        %495 = vmatprep.subr.mxu0 0.0
        %496 = vmatpush1.msra.mxu0 0.0
        %497 = vmatprep.subr.mxu0 0.0
        %498 = vmatpush1.msra.mxu0 0.0
        %499 = vmatprep.subr.mxu0 0.0
        %500 = vmatpush1.msra.mxu0 0.0
        %501 = vmatprep.subr.mxu0 0.0
        %502 = vmatpush1.msra.mxu0 0.0
        %503 = vmatprep.subr.mxu0 0.0
        %504 = vmatpush1.msra.mxu0 0.0
        %505 = vmatprep.subr.mxu0 0.0
        %506 = vmatpush1.msra.mxu0 0.0
        %507 = vmatprep.subr.mxu0 0.0
        %508 = vmatpush1.msra.mxu0 0.0
        %509 = vmatprep.subr.mxu0 0.0
        %510 = vmatpush1.msra.mxu0 0.0
        %511 = vmatprep.subr.mxu0 0.0
        %512 = vmatpush1.msra.mxu0 0.0
        %513 = vmatprep.subr.mxu0 0.0
        %514 = vmatpush1.msra.mxu0 0.0
        %515 = vmatprep.subr.mxu0 0.0
        %516 = vmatpush1.msra.mxu0 0.0
        %517 = vmatprep.subr.mxu0 0.0
        %518 = vmatpush1.msra.mxu0 0.0
        %519 = vmatprep.subr.mxu0 0.0
        %520 = vmatpush1.msra.mxu0 0.0
        %521 = vmatprep.subr.mxu0 0.0
        %522 = vmatpush1.msra.mxu0 0.0
        %523 = vmatprep.subr.mxu0 0.0
        %524 = vmatpush1.msra.mxu0 0.0
        %525 = vmatprep.subr.mxu0 0.0
        %526 = vmatpush1.msra.mxu0 0.0
        %527 = vmatprep.subr.mxu0 0.0
        %528 = vmatpush1.msra.mxu0 0.0
        %529 = vmatprep.subr.mxu0 0.0
        %530 = vmatpush1.msra.mxu0 0.0
        %531 = vmatprep.subr.mxu0 0.0
        %532 = vmatpush1.msra.mxu0 0.0
        %533 = vmatprep.subr.mxu0 0.0
        %534 = vmatpush1.msra.mxu0 0.0
        %535 = vmatprep.subr.mxu0 0.0
        %536 = vmatpush1.msra.mxu0 0.0
        %537 = vmatprep.subr.mxu0 0.0
        %538 = vmatpush1.msra.mxu0 0.0
        %539 = vmatprep.subr.mxu0 0.0
        %540 = vmatpush1.msra.mxu0 0.0
        %541 = vmatprep.mubr.f32.mxu0 0.0
        %542 = vmatmul.mubr.f32.gmra.mrb[0].mxu0 %v184
        %v543 = vpop.f32.mrb[0].mxu0
        %v544 = vadd.f32 %v474, %v543
        %v545 = vpop.f32.mrb[0].mxu0
        %546 = vdwg.mxu0
        %s547 = scalar_lea.vmem %s149, 3 [#allocation2]
        %v548 = vld [vmem:[%s547] ss:$2 sm:$0x7f]
        %v550 = vsel %vm182, %v548, 0
        %552 = vmatprep.subr.mxu0 0.0
        %553 = vmatpush1.msra.mxu0 %v331
        %554 = vmatprep.subr.mxu0 0.0
        %555 = vmatpush1.msra.mxu0 %v332
        %556 = vmatprep.subr.mxu0 0.0
        %557 = vmatpush1.msra.mxu0 0.0
        %558 = vmatprep.subr.mxu0 0.0
        %559 = vmatpush1.msra.mxu0 0.0
        %560 = vmatprep.subr.mxu0 0.0
        %561 = vmatpush1.msra.mxu0 0.0
        %562 = vmatprep.subr.mxu0 0.0
        %563 = vmatpush1.msra.mxu0 0.0
        %564 = vmatprep.subr.mxu0 0.0
        %565 = vmatpush1.msra.mxu0 0.0
        %566 = vmatprep.subr.mxu0 0.0
        %567 = vmatpush1.msra.mxu0 0.0
        %568 = vmatprep.subr.mxu0 0.0
        %569 = vmatpush1.msra.mxu0 0.0
        %570 = vmatprep.subr.mxu0 0.0
        %571 = vmatpush1.msra.mxu0 0.0
        %572 = vmatprep.subr.mxu0 0.0
        %573 = vmatpush1.msra.mxu0 0.0
        %574 = vmatprep.subr.mxu0 0.0
        %575 = vmatpush1.msra.mxu0 0.0
        %576 = vmatprep.subr.mxu0 0.0
        %577 = vmatpush1.msra.mxu0 0.0
        %578 = vmatprep.subr.mxu0 0.0
        %579 = vmatpush1.msra.mxu0 0.0
        %580 = vmatprep.subr.mxu0 0.0
        %581 = vmatpush1.msra.mxu0 0.0
        %582 = vmatprep.subr.mxu0 0.0
        %583 = vmatpush1.msra.mxu0 0.0
        %584 = vmatprep.subr.mxu0 0.0
        %585 = vmatpush1.msra.mxu0 0.0
        %586 = vmatprep.subr.mxu0 0.0
        %587 = vmatpush1.msra.mxu0 0.0
        %588 = vmatprep.subr.mxu0 0.0
        %589 = vmatpush1.msra.mxu0 0.0
        %590 = vmatprep.subr.mxu0 0.0
        %591 = vmatpush1.msra.mxu0 0.0
        %592 = vmatprep.subr.mxu0 0.0
        %593 = vmatpush1.msra.mxu0 0.0
        %594 = vmatprep.subr.mxu0 0.0
        %595 = vmatpush1.msra.mxu0 0.0
        %596 = vmatprep.subr.mxu0 0.0
        %597 = vmatpush1.msra.mxu0 0.0
        %598 = vmatprep.subr.mxu0 0.0
        %599 = vmatpush1.msra.mxu0 0.0
        %600 = vmatprep.subr.mxu0 0.0
        %601 = vmatpush1.msra.mxu0 0.0
        %602 = vmatprep.subr.mxu0 0.0
        %603 = vmatpush1.msra.mxu0 0.0
        %604 = vmatprep.subr.mxu0 0.0
        %605 = vmatpush1.msra.mxu0 0.0
        %606 = vmatprep.subr.mxu0 0.0
        %607 = vmatpush1.msra.mxu0 0.0
        %608 = vmatprep.subr.mxu0 0.0
        %609 = vmatpush1.msra.mxu0 0.0
        %610 = vmatprep.subr.mxu0 0.0
        %611 = vmatpush1.msra.mxu0 0.0
        %612 = vmatprep.subr.mxu0 0.0
        %613 = vmatpush1.msra.mxu0 0.0
        %614 = vmatprep.subr.mxu0 0.0
        %615 = vmatpush1.msra.mxu0 0.0
        %616 = vmatprep.mubr.f32.mxu0 0.0
        %617 = vmatmul.mubr.f32.gmra.mrb[0].mxu0 %v550
        %v618 = vpop.f32.mrb[0].mxu0
        %v619 = vadd.f32 0.0, %v618
        %v620 = vpop.f32.mrb[0].mxu0
        %621 = vdwg.mxu0
        %v622 = vadd.f32 %v544, %v619
        %v623 = vmax.f32 %v406, %v622
        %625 = vrot.lane.b32.xlu0 %v623, 72
        %v626 = vpop.permute.xlu0 %625
        %v628 = vmax.f32 %v623, %v626
        %v629 = vld [vmem:[#allocation4 + $0x198] sm:$0x1]
        %v630 = vlaneseq
        %v631 = vshrl.u32 %v630, 7
        %v632 = vsub.s32 0, %v631
        %v633 = vrot.slane %v629, %v632
        %v634 = vadd.f32 %v628, %v633
        %v635 = vmax.f32 %v634, 0.0
        %v636 = vld [vmem:[#allocation4 + $0x30] sm:$0xff]
        %v637 = vld [vmem:[#allocation4 + $0x38] sm:$0xff]
        %v638 = vld [vmem:[#allocation4 + $0x40] sm:$0xff]
        %v639 = vld [vmem:[#allocation4 + $0x48] sm:$0xff]
        %v640 = vld [vmem:[#allocation4 + $0x50] sm:$0xff]
        %v641 = vld [vmem:[#allocation4 + $0x58] sm:$0xff]
        %v642 = vld [vmem:[#allocation4 + $0x60] sm:$0xff]
        %v643 = vld [vmem:[#allocation4 + $0x68] sm:$0xff]
        %v644 = vld [vmem:[#allocation4 + $0x70] sm:$0xff]
        %v645 = vld [vmem:[#allocation4 + $0x78] sm:$0xff]
        %v646 = vld [vmem:[#allocation4 + $0x80] sm:$0xff]
        %v647 = vld [vmem:[#allocation4 + $0x88] sm:$0xff]
        %v648 = vld [vmem:[#allocation4 + $0x90] sm:$0xff]
        %v649 = vld [vmem:[#allocation4 + $0x98] sm:$0xff]
        %v651 = vrot.slane %v635, 1
        %vm652 = vcmask 457728
        %v653 = vsel %vm652, %v651, 0
        %655 = vmatprep.subr.mxu0 0.0
        %656 = vmatpush1.msra.mxu0 %v643
        %657 = vmatprep.subr.mxu0 0.0
        %658 = vmatpush1.msra.mxu0 %v644
        %659 = vmatprep.subr.mxu0 0.0
        %660 = vmatpush1.msra.mxu0 %v645
        %661 = vmatprep.subr.mxu0 0.0
        %662 = vmatpush1.msra.mxu0 %v646
        %663 = vmatprep.subr.mxu0 0.0
        %664 = vmatpush1.msra.mxu0 %v647
        %665 = vmatprep.subr.mxu0 0.0
        %666 = vmatpush1.msra.mxu0 %v648
        %667 = vmatprep.subr.mxu0 0.0
        %668 = vmatpush1.msra.mxu0 %v649
        %669 = vmatprep.subr.mxu0 0.0
        %670 = vmatpush1.msra.mxu0 0.0
        %671 = vmatprep.subr.mxu0 0.0
        %672 = vmatpush1.msra.mxu0 0.0
        %673 = vmatprep.subr.mxu0 0.0
        %674 = vmatpush1.msra.mxu0 0.0
        %675 = vmatprep.subr.mxu0 0.0
        %676 = vmatpush1.msra.mxu0 0.0
        %677 = vmatprep.subr.mxu0 0.0
        %678 = vmatpush1.msra.mxu0 0.0
        %679 = vmatprep.subr.mxu0 0.0
        %680 = vmatpush1.msra.mxu0 0.0
        %681 = vmatprep.subr.mxu0 0.0
        %682 = vmatpush1.msra.mxu0 0.0
        %683 = vmatprep.subr.mxu0 0.0
        %684 = vmatpush1.msra.mxu0 0.0
        %685 = vmatprep.subr.mxu0 0.0
        %686 = vmatpush1.msra.mxu0 0.0
        %687 = vmatprep.subr.mxu0 0.0
        %688 = vmatpush1.msra.mxu0 0.0
        %689 = vmatprep.subr.mxu0 0.0
        %690 = vmatpush1.msra.mxu0 0.0
        %691 = vmatprep.subr.mxu0 0.0
        %692 = vmatpush1.msra.mxu0 0.0
        %693 = vmatprep.subr.mxu0 0.0
        %694 = vmatpush1.msra.mxu0 0.0
        %695 = vmatprep.subr.mxu0 0.0
        %696 = vmatpush1.msra.mxu0 0.0
        %697 = vmatprep.subr.mxu0 0.0
        %698 = vmatpush1.msra.mxu0 0.0
        %699 = vmatprep.subr.mxu0 0.0
        %700 = vmatpush1.msra.mxu0 0.0
        %701 = vmatprep.subr.mxu0 0.0
        %702 = vmatpush1.msra.mxu0 0.0
        %703 = vmatprep.subr.mxu0 0.0
        %704 = vmatpush1.msra.mxu0 0.0
        %705 = vmatprep.subr.mxu0 0.0
        %706 = vmatpush1.msra.mxu0 0.0
        %707 = vmatprep.subr.mxu0 0.0
        %708 = vmatpush1.msra.mxu0 0.0
        %709 = vmatprep.subr.mxu0 0.0
        %710 = vmatpush1.msra.mxu0 0.0
        %711 = vmatprep.subr.mxu0 0.0
        %712 = vmatpush1.msra.mxu0 0.0
        %713 = vmatprep.subr.mxu0 0.0
        %714 = vmatpush1.msra.mxu0 0.0
        %715 = vmatprep.subr.mxu0 0.0
        %716 = vmatpush1.msra.mxu0 0.0
        %717 = vmatprep.subr.mxu0 0.0
        %718 = vmatpush1.msra.mxu0 0.0
        %719 = vmatprep.mubr.f32.mxu0 0.0
        %720 = vmatmul.mubr.f32.gmra.mrb[0].mxu0 %v653
        %v721 = vpop.f32.mrb[0].mxu0
        %v722 = vadd.f32 0.0, %v721
        %v723 = vpop.f32.mrb[0].mxu0
        %724 = vdwg.mxu0
        %v725 = vsel %vm652, %v635, 0
        %727 = vmatprep.subr.mxu0 0.0
        %728 = vmatpush1.msra.mxu0 %v636
        %729 = vmatprep.subr.mxu0 0.0
        %730 = vmatpush1.msra.mxu0 %v637
        %731 = vmatprep.subr.mxu0 0.0
        %732 = vmatpush1.msra.mxu0 %v638
        %733 = vmatprep.subr.mxu0 0.0
        %734 = vmatpush1.msra.mxu0 %v639
        %735 = vmatprep.subr.mxu0 0.0
        %736 = vmatpush1.msra.mxu0 %v640
        %737 = vmatprep.subr.mxu0 0.0
        %738 = vmatpush1.msra.mxu0 %v641
        %739 = vmatprep.subr.mxu0 0.0
        %740 = vmatpush1.msra.mxu0 %v642
        %741 = vmatprep.subr.mxu0 0.0
        %742 = vmatpush1.msra.mxu0 0.0
        %743 = vmatprep.subr.mxu0 0.0
        %744 = vmatpush1.msra.mxu0 0.0
        %745 = vmatprep.subr.mxu0 0.0
        %746 = vmatpush1.msra.mxu0 0.0
        %747 = vmatprep.subr.mxu0 0.0
        %748 = vmatpush1.msra.mxu0 0.0
        %749 = vmatprep.subr.mxu0 0.0
        %750 = vmatpush1.msra.mxu0 0.0
        %751 = vmatprep.subr.mxu0 0.0
        %752 = vmatpush1.msra.mxu0 0.0
        %753 = vmatprep.subr.mxu0 0.0
        %754 = vmatpush1.msra.mxu0 0.0
        %755 = vmatprep.subr.mxu0 0.0
        %756 = vmatpush1.msra.mxu0 0.0
        %757 = vmatprep.subr.mxu0 0.0
        %758 = vmatpush1.msra.mxu0 0.0
        %759 = vmatprep.subr.mxu0 0.0
        %760 = vmatpush1.msra.mxu0 0.0
        %761 = vmatprep.subr.mxu0 0.0
        %762 = vmatpush1.msra.mxu0 0.0
        %763 = vmatprep.subr.mxu0 0.0
        %764 = vmatpush1.msra.mxu0 0.0
        %765 = vmatprep.subr.mxu0 0.0
        %766 = vmatpush1.msra.mxu0 0.0
        %767 = vmatprep.subr.mxu0 0.0
        %768 = vmatpush1.msra.mxu0 0.0
        %769 = vmatprep.subr.mxu0 0.0
        %770 = vmatpush1.msra.mxu0 0.0
        %771 = vmatprep.subr.mxu0 0.0
        %772 = vmatpush1.msra.mxu0 0.0
        %773 = vmatprep.subr.mxu0 0.0
        %774 = vmatpush1.msra.mxu0 0.0
        %775 = vmatprep.subr.mxu0 0.0
        %776 = vmatpush1.msra.mxu0 0.0
        %777 = vmatprep.subr.mxu0 0.0
        %778 = vmatpush1.msra.mxu0 0.0
        %779 = vmatprep.subr.mxu0 0.0
        %780 = vmatpush1.msra.mxu0 0.0
        %781 = vmatprep.subr.mxu0 0.0
        %782 = vmatpush1.msra.mxu0 0.0
        %783 = vmatprep.subr.mxu0 0.0
        %784 = vmatpush1.msra.mxu0 0.0
        %785 = vmatprep.subr.mxu0 0.0
        %786 = vmatpush1.msra.mxu0 0.0
        %787 = vmatprep.subr.mxu0 0.0
        %788 = vmatpush1.msra.mxu0 0.0
        %789 = vmatprep.subr.mxu0 0.0
        %790 = vmatpush1.msra.mxu0 0.0
        %791 = vmatprep.mubr.f32.mxu0 0.0
        %792 = vmatmul.mubr.f32.gmra.mrb[0].mxu0 %v725
        %v793 = vpop.f32.mrb[0].mxu0
        %v794 = vadd.f32 %v722, %v793
        %v795 = vpop.f32.mrb[0].mxu0
        %796 = vdwg.mxu0
        %v797 = vld [vmem:[#allocation4 + $0xa0] sm:$0xff]
        %v798 = vld [vmem:[#allocation4 + $0xa8] sm:$0xff]
        %v799 = vld [vmem:[#allocation4 + $0xb0] sm:$0xff]
        %v800 = vld [vmem:[#allocation4 + $0xb8] sm:$0xff]
        %v801 = vld [vmem:[#allocation4 + $0xc0] sm:$0xff]
        %v802 = vld [vmem:[#allocation4 + $0xc8] sm:$0xff]
        %v803 = vld [vmem:[#allocation4 + $0xd0] sm:$0xff]
        %v804 = vrot.slane %v635, 2
        %v805 = vsel %vm652, %v804, 0
        %807 = vmatprep.subr.mxu0 0.0
        %808 = vmatpush1.msra.mxu0 %v797
        %809 = vmatprep.subr.mxu0 0.0
        %810 = vmatpush1.msra.mxu0 %v798
        %811 = vmatprep.subr.mxu0 0.0
        %812 = vmatpush1.msra.mxu0 %v799
        %813 = vmatprep.subr.mxu0 0.0
        %814 = vmatpush1.msra.mxu0 %v800
        %815 = vmatprep.subr.mxu0 0.0
        %816 = vmatpush1.msra.mxu0 %v801
        %817 = vmatprep.subr.mxu0 0.0
        %818 = vmatpush1.msra.mxu0 %v802
        %819 = vmatprep.subr.mxu0 0.0
        %820 = vmatpush1.msra.mxu0 %v803
        %821 = vmatprep.subr.mxu0 0.0
        %822 = vmatpush1.msra.mxu0 0.0
        %823 = vmatprep.subr.mxu0 0.0
        %824 = vmatpush1.msra.mxu0 0.0
        %825 = vmatprep.subr.mxu0 0.0
        %826 = vmatpush1.msra.mxu0 0.0
        %827 = vmatprep.subr.mxu0 0.0
        %828 = vmatpush1.msra.mxu0 0.0
        %829 = vmatprep.subr.mxu0 0.0
        %830 = vmatpush1.msra.mxu0 0.0
        %831 = vmatprep.subr.mxu0 0.0
        %832 = vmatpush1.msra.mxu0 0.0
        %833 = vmatprep.subr.mxu0 0.0
        %834 = vmatpush1.msra.mxu0 0.0
        %835 = vmatprep.subr.mxu0 0.0
        %836 = vmatpush1.msra.mxu0 0.0
        %837 = vmatprep.subr.mxu0 0.0
        %838 = vmatpush1.msra.mxu0 0.0
        %839 = vmatprep.subr.mxu0 0.0
        %840 = vmatpush1.msra.mxu0 0.0
        %841 = vmatprep.subr.mxu0 0.0
        %842 = vmatpush1.msra.mxu0 0.0
        %843 = vmatprep.subr.mxu0 0.0
        %844 = vmatpush1.msra.mxu0 0.0
        %845 = vmatprep.subr.mxu0 0.0
        %846 = vmatpush1.msra.mxu0 0.0
        %847 = vmatprep.subr.mxu0 0.0
        %848 = vmatpush1.msra.mxu0 0.0
        %849 = vmatprep.subr.mxu0 0.0
        %850 = vmatpush1.msra.mxu0 0.0
        %851 = vmatprep.subr.mxu0 0.0
        %852 = vmatpush1.msra.mxu0 0.0
        %853 = vmatprep.subr.mxu0 0.0
        %854 = vmatpush1.msra.mxu0 0.0
        %855 = vmatprep.subr.mxu0 0.0
        %856 = vmatpush1.msra.mxu0 0.0
        %857 = vmatprep.subr.mxu0 0.0
        %858 = vmatpush1.msra.mxu0 0.0
        %859 = vmatprep.subr.mxu0 0.0
        %860 = vmatpush1.msra.mxu0 0.0
        %861 = vmatprep.subr.mxu0 0.0
        %862 = vmatpush1.msra.mxu0 0.0
        %863 = vmatprep.subr.mxu0 0.0
        %864 = vmatpush1.msra.mxu0 0.0
        %865 = vmatprep.subr.mxu0 0.0
        %866 = vmatpush1.msra.mxu0 0.0
        %867 = vmatprep.subr.mxu0 0.0
        %868 = vmatpush1.msra.mxu0 0.0
        %869 = vmatprep.subr.mxu0 0.0
        %870 = vmatpush1.msra.mxu0 0.0
        %871 = vmatprep.mubr.f32.mxu0 0.0
        %872 = vmatmul.mubr.f32.gmra.mrb[0].mxu0 %v805
        %v873 = vpop.f32.mrb[0].mxu0
        %v874 = vadd.f32 0.0, %v873
        %v875 = vpop.f32.mrb[0].mxu0
        %876 = vdwg.mxu0
        %v877 = vadd.f32 %v794, %v874
        %v879 = vrot.slane %v877, 1
        %v881 = vmax.f32 %v877, %v879
        %v883 = vrot.slane %v881, 1
        %vm885 = vcmask 1040384
        %v886 = vsel %vm885, %v881, %v883
        %888 = vrot.lane.b32.xlu0 %v886, 96
        %v889 = vpop.permute.xlu0 %888
        %v891 = vmax.f32 %v886, %v889
        %v892 = vld [vmem:[#allocation4 + $0x1a0] sm:$0x1]
        %v893 = vlaneseq
        %v894 = vshrl.u32 %v893, 7
        %v895 = vsub.s32 0, %v894
        %v896 = vrot.slane %v892, %v895
        %v897 = vadd.f32 %v891, %v896
        %v898 = vmax.f32 %v897, 0.0
        %v899 = vld [vmem:[#allocation4 + $0xd8] sm:$0xff]
        %v900 = vld [vmem:[#allocation4 + $0xe0] sm:$0xff]
        %v901 = vld [vmem:[#allocation4 + $0xe8] sm:$0xff]
        %v902 = vld [vmem:[#allocation4 + $0xf0] sm:$0xff]
        %v903 = vld [vmem:[#allocation4 + $0xf8] sm:$0xff]
        %v904 = vld [vmem:[#allocation4 + $0x100] sm:$0xff]
        %v905 = vld [vmem:[#allocation4 + $0x108] sm:$0xff]
        %v906 = vld [vmem:[#allocation4 + $0x110] sm:$0xff]
        %v908 = vrot.slane %v898, 1
        %vm909 = vcmask 261120
        %v910 = vsel %vm909, %v908, 0
        %912 = vmatprep.subr.mxu0 0.0
        %913 = vmatpush1.msra.mxu0 %v903
        %914 = vmatprep.subr.mxu0 0.0
        %915 = vmatpush1.msra.mxu0 %v904
        %916 = vmatprep.subr.mxu0 0.0
        %917 = vmatpush1.msra.mxu0 %v905
        %918 = vmatprep.subr.mxu0 0.0
        %919 = vmatpush1.msra.mxu0 %v906
        %920 = vmatprep.subr.mxu0 0.0
        %921 = vmatpush1.msra.mxu0 0.0
        %922 = vmatprep.subr.mxu0 0.0
        %923 = vmatpush1.msra.mxu0 0.0
        %924 = vmatprep.subr.mxu0 0.0
        %925 = vmatpush1.msra.mxu0 0.0
        %926 = vmatprep.subr.mxu0 0.0
        %927 = vmatpush1.msra.mxu0 0.0
        %928 = vmatprep.subr.mxu0 0.0
        %929 = vmatpush1.msra.mxu0 0.0
        %930 = vmatprep.subr.mxu0 0.0
        %931 = vmatpush1.msra.mxu0 0.0
        %932 = vmatprep.subr.mxu0 0.0
        %933 = vmatpush1.msra.mxu0 0.0
        %934 = vmatprep.subr.mxu0 0.0
        %935 = vmatpush1.msra.mxu0 0.0
        %936 = vmatprep.subr.mxu0 0.0
        %937 = vmatpush1.msra.mxu0 0.0
        %938 = vmatprep.subr.mxu0 0.0
        %939 = vmatpush1.msra.mxu0 0.0
        %940 = vmatprep.subr.mxu0 0.0
        %941 = vmatpush1.msra.mxu0 0.0
        %942 = vmatprep.subr.mxu0 0.0
        %943 = vmatpush1.msra.mxu0 0.0
        %944 = vmatprep.subr.mxu0 0.0
        %945 = vmatpush1.msra.mxu0 0.0
        %946 = vmatprep.subr.mxu0 0.0
        %947 = vmatpush1.msra.mxu0 0.0
        %948 = vmatprep.subr.mxu0 0.0
        %949 = vmatpush1.msra.mxu0 0.0
        %950 = vmatprep.subr.mxu0 0.0
        %951 = vmatpush1.msra.mxu0 0.0
        %952 = vmatprep.subr.mxu0 0.0
        %953 = vmatpush1.msra.mxu0 0.0
        %954 = vmatprep.subr.mxu0 0.0
        %955 = vmatpush1.msra.mxu0 0.0
        %956 = vmatprep.subr.mxu0 0.0
        %957 = vmatpush1.msra.mxu0 0.0
        %958 = vmatprep.subr.mxu0 0.0
        %959 = vmatpush1.msra.mxu0 0.0
        %960 = vmatprep.subr.mxu0 0.0
        %961 = vmatpush1.msra.mxu0 0.0
        %962 = vmatprep.subr.mxu0 0.0
        %963 = vmatpush1.msra.mxu0 0.0
        %964 = vmatprep.subr.mxu0 0.0
        %965 = vmatpush1.msra.mxu0 0.0
        %966 = vmatprep.subr.mxu0 0.0
        %967 = vmatpush1.msra.mxu0 0.0
        %968 = vmatprep.subr.mxu0 0.0
        %969 = vmatpush1.msra.mxu0 0.0
        %970 = vmatprep.subr.mxu0 0.0
        %971 = vmatpush1.msra.mxu0 0.0
        %972 = vmatprep.subr.mxu0 0.0
        %973 = vmatpush1.msra.mxu0 0.0
        %974 = vmatprep.subr.mxu0 0.0
        %975 = vmatpush1.msra.mxu0 0.0
        %976 = vmatprep.mubr.f32.mxu0 0.0
        %977 = vmatmul.mubr.f32.gmra.mrb[0].mxu0 %v910
        %v978 = vpop.f32.mrb[0].mxu0
        %v979 = vadd.f32 0.0, %v978
        %v980 = vpop.f32.mrb[0].mxu0
        %981 = vdwg.mxu0
        %v982 = vsel %vm909, %v898, 0
        %984 = vmatprep.subr.mxu0 0.0
        %985 = vmatpush1.msra.mxu0 %v899
        %986 = vmatprep.subr.mxu0 0.0
        %987 = vmatpush1.msra.mxu0 %v900
        %988 = vmatprep.subr.mxu0 0.0
        %989 = vmatpush1.msra.mxu0 %v901
        %990 = vmatprep.subr.mxu0 0.0
        %991 = vmatpush1.msra.mxu0 %v902
        %992 = vmatprep.subr.mxu0 0.0
        %993 = vmatpush1.msra.mxu0 0.0
        %994 = vmatprep.subr.mxu0 0.0
        %995 = vmatpush1.msra.mxu0 0.0
        %996 = vmatprep.subr.mxu0 0.0
        %997 = vmatpush1.msra.mxu0 0.0
        %998 = vmatprep.subr.mxu0 0.0
        %999 = vmatpush1.msra.mxu0 0.0
        %1000 = vmatprep.subr.mxu0 0.0
        %1001 = vmatpush1.msra.mxu0 0.0
        %1002 = vmatprep.subr.mxu0 0.0
        %1003 = vmatpush1.msra.mxu0 0.0
        %1004 = vmatprep.subr.mxu0 0.0
        %1005 = vmatpush1.msra.mxu0 0.0
        %1006 = vmatprep.subr.mxu0 0.0
        %1007 = vmatpush1.msra.mxu0 0.0
        %1008 = vmatprep.subr.mxu0 0.0
        %1009 = vmatpush1.msra.mxu0 0.0
        %1010 = vmatprep.subr.mxu0 0.0
        %1011 = vmatpush1.msra.mxu0 0.0
        %1012 = vmatprep.subr.mxu0 0.0
        %1013 = vmatpush1.msra.mxu0 0.0
        %1014 = vmatprep.subr.mxu0 0.0
        %1015 = vmatpush1.msra.mxu0 0.0
        %1016 = vmatprep.subr.mxu0 0.0
        %1017 = vmatpush1.msra.mxu0 0.0
        %1018 = vmatprep.subr.mxu0 0.0
        %1019 = vmatpush1.msra.mxu0 0.0
        %1020 = vmatprep.subr.mxu0 0.0
        %1021 = vmatpush1.msra.mxu0 0.0
        %1022 = vmatprep.subr.mxu0 0.0
        %1023 = vmatpush1.msra.mxu0 0.0
        %1024 = vmatprep.subr.mxu0 0.0
        %1025 = vmatpush1.msra.mxu0 0.0
        %1026 = vmatprep.subr.mxu0 0.0
        %1027 = vmatpush1.msra.mxu0 0.0
        %1028 = vmatprep.subr.mxu0 0.0
        %1029 = vmatpush1.msra.mxu0 0.0
        %1030 = vmatprep.subr.mxu0 0.0
        %1031 = vmatpush1.msra.mxu0 0.0
        %1032 = vmatprep.subr.mxu0 0.0
        %1033 = vmatpush1.msra.mxu0 0.0
        %1034 = vmatprep.subr.mxu0 0.0
        %1035 = vmatpush1.msra.mxu0 0.0
        %1036 = vmatprep.subr.mxu0 0.0
        %1037 = vmatpush1.msra.mxu0 0.0
        %1038 = vmatprep.subr.mxu0 0.0
        %1039 = vmatpush1.msra.mxu0 0.0
        %1040 = vmatprep.subr.mxu0 0.0
        %1041 = vmatpush1.msra.mxu0 0.0
        %1042 = vmatprep.subr.mxu0 0.0
        %1043 = vmatpush1.msra.mxu0 0.0
        %1044 = vmatprep.subr.mxu0 0.0
        %1045 = vmatpush1.msra.mxu0 0.0
        %1046 = vmatprep.subr.mxu0 0.0
        %1047 = vmatpush1.msra.mxu0 0.0
        %1048 = vmatprep.mubr.f32.mxu0 0.0
        %1049 = vmatmul.mubr.f32.gmra.mrb[0].mxu0 %v982
        %v1050 = vpop.f32.mrb[0].mxu0
        %v1051 = vadd.f32 %v979, %v1050
        %v1052 = vpop.f32.mrb[0].mxu0
        %1053 = vdwg.mxu0
        %v1054 = vld [vmem:[#allocation4 + $0x1a8] sm:$0x1]
        %v1055 = vadd.f32 %v1051, %v1054
        %v1056 = vmax.f32 %v1055, 0.0
        %v1057 = vld [vmem:[#allocation4 + $0x118] sm:$0xff]
        %v1058 = vld [vmem:[#allocation4 + $0x120] sm:$0xff]
        %v1059 = vld [vmem:[#allocation4 + $0x128] sm:$0xff]
        %v1060 = vld [vmem:[#allocation4 + $0x130] sm:$0xff]
        %v1061 = vld [vmem:[#allocation4 + $0x138] sm:$0xff]
        %v1062 = vld [vmem:[#allocation4 + $0x140] sm:$0xff]
        %v1063 = vld [vmem:[#allocation4 + $0x148] sm:$0xff]
        %v1064 = vld [vmem:[#allocation4 + $0x150] sm:$0xff]
        %v1065 = vld [vmem:[#allocation4 + $0x158] sm:$0xff]
        %v1066 = vld [vmem:[#allocation4 + $0x160] sm:$0xff]
        %v1067 = vld [vmem:[#allocation4 + $0x168] sm:$0xff]
        %v1068 = vld [vmem:[#allocation4 + $0x170] sm:$0xff]
        %v1069 = vld [vmem:[#allocation4 + $0x178] sm:$0xff]
        %v1070 = vld [vmem:[#allocation4 + $0x180] sm:$0xff]
        %v1071 = vld [vmem:[#allocation4 + $0x188] sm:$0xff]
        %v1072 = vld [vmem:[#allocation4 + $0x190] sm:$0xff]
        %v1073 = vld [vmem:[#allocation4 + $0x1b0] sm:$0x1]
        %1074 = vmatprep.subr.mxu0 0.0
        %1075 = vmatpush1.msra.mxu0 %v1057
        %1076 = vmatprep.subr.mxu0 0.0
        %1077 = vmatpush1.msra.mxu0 %v1058
        %1078 = vmatprep.subr.mxu0 0.0
        %1079 = vmatpush1.msra.mxu0 %v1059
        %1080 = vmatprep.subr.mxu0 0.0
        %1081 = vmatpush1.msra.mxu0 %v1060
        %1082 = vmatprep.subr.mxu0 0.0
        %1083 = vmatpush1.msra.mxu0 %v1061
        %1084 = vmatprep.subr.mxu0 0.0
        %1085 = vmatpush1.msra.mxu0 %v1062
        %1086 = vmatprep.subr.mxu0 0.0
        %1087 = vmatpush1.msra.mxu0 %v1063
        %1088 = vmatprep.subr.mxu0 0.0
        %1089 = vmatpush1.msra.mxu0 %v1064
        %1090 = vmatprep.subr.mxu0 0.0
        %1091 = vmatpush1.msra.mxu0 %v1065
        %1092 = vmatprep.subr.mxu0 0.0
        %1093 = vmatpush1.msra.mxu0 %v1066
        %1094 = vmatprep.subr.mxu0 0.0
        %1095 = vmatpush1.msra.mxu0 %v1067
        %1096 = vmatprep.subr.mxu0 0.0
        %1097 = vmatpush1.msra.mxu0 %v1068
        %1098 = vmatprep.subr.mxu0 0.0
        %1099 = vmatpush1.msra.mxu0 %v1069
        %1100 = vmatprep.subr.mxu0 0.0
        %1101 = vmatpush1.msra.mxu0 %v1070
        %1102 = vmatprep.subr.mxu0 0.0
        %1103 = vmatpush1.msra.mxu0 %v1071
        %1104 = vmatprep.subr.mxu0 0.0
        %1105 = vmatpush1.msra.mxu0 %v1072
        %1106 = vmatprep.subr.mxu0 0.0
        %1107 = vmatpush1.msra.mxu0 0.0
        %1108 = vmatprep.subr.mxu0 0.0
        %1109 = vmatpush1.msra.mxu0 0.0
        %1110 = vmatprep.subr.mxu0 0.0
        %1111 = vmatpush1.msra.mxu0 0.0
        %1112 = vmatprep.subr.mxu0 0.0
        %1113 = vmatpush1.msra.mxu0 0.0
        %1114 = vmatprep.subr.mxu0 0.0
        %1115 = vmatpush1.msra.mxu0 0.0
        %1116 = vmatprep.subr.mxu0 0.0
        %1117 = vmatpush1.msra.mxu0 0.0
        %1118 = vmatprep.subr.mxu0 0.0
        %1119 = vmatpush1.msra.mxu0 0.0
        %1120 = vmatprep.subr.mxu0 0.0
        %1121 = vmatpush1.msra.mxu0 0.0
        %1122 = vmatprep.subr.mxu0 0.0
        %1123 = vmatpush1.msra.mxu0 0.0
        %1124 = vmatprep.subr.mxu0 0.0
        %1125 = vmatpush1.msra.mxu0 0.0
        %1126 = vmatprep.subr.mxu0 0.0
        %1127 = vmatpush1.msra.mxu0 0.0
        %1128 = vmatprep.subr.mxu0 0.0
        %1129 = vmatpush1.msra.mxu0 0.0
        %1130 = vmatprep.subr.mxu0 0.0
        %1131 = vmatpush1.msra.mxu0 0.0
        %1132 = vmatprep.subr.mxu0 0.0
        %1133 = vmatpush1.msra.mxu0 0.0
        %1134 = vmatprep.subr.mxu0 0.0
        %1135 = vmatpush1.msra.mxu0 0.0
        %1136 = vmatprep.subr.mxu0 0.0
        %1137 = vmatpush1.msra.mxu0 0.0
        %1138 = vmatprep.mubr.f32.mxu0 0.0
        %1139 = vmatmul.mubr.f32.gmra.mrb[0].mxu0 %v1056
        %v1140 = vpop.f32.mrb[0].mxu0
        %v1141 = vadd.f32 %v1073, %v1140
        %v1142 = vpop.f32.mrb[0].mxu0
        %1143 = vdwg.mxu0
        %1144 = vst [vmem:[%s174] sm:$0x1] %v1141
        %p1145 = scmp.lt.s32.totalorder %s17, 1
        %s1146 = scalar_select %p1145, %s17, 1
        %s1147 = scalar_lea.vmem %s2, %s1146
        // Predicated region
        $region37: #{simple_cnn_forward.1} parent=27 // pred_check
          %p1148 = pneg %p82
        $region38: #{simple_cnn_forward.1} parent=27 // pred_check_branch
          %1150 = sbr.rel (%p1148) target = $region40
        $region39: #{simple_cnn_forward.1} parent=27 // pred_region
          _
        $region40: #{simple_cnn_forward.1} parent=27 // pred_fallthru
          _
      $region28: #{simple_cnn_forward.1} parent=5 // pred_fallthru
        _
      %p1151 = scmp.le.s32.totalorder 2, %s12
      // Predicated region
      $region41: #{simple_cnn_forward.1} parent=5 // pred_check
        %p1152 = pneg %p1151
      $region42: #{simple_cnn_forward.1} parent=5 // pred_check_branch
        %1154 = sbr.rel (%p1152) target = $region44
      $region43: #{simple_cnn_forward.1} parent=5 // pred_region
        %s1155 = ssub.s32 %s12, 2
        // Predicated region
        $region45: #{simple_cnn_forward.1} parent=43 // pred_check
          %p1156 = pneg %p88
        $region46: #{simple_cnn_forward.1} parent=43 // pred_check_branch
          %1158 = sbr.rel (%p1156) target = $region48
        $region47: #{simple_cnn_forward.1} parent=43 // pred_region
          %p1159 = scmp.lt.s32.totalorder %s18, 1
          %s1160 = scalar_select %p1159, %s18, 1
          %s1161 = scalar_lea.vmem %s2, %s1160
        $region48: #{simple_cnn_forward.1} parent=43 // pred_fallthru
          _
      $region44: #{simple_cnn_forward.1} parent=5 // pred_fallthru
        _
    $region6: #{simple_cnn_forward.1} parent=1 // loop_footer
      %s16 = sadd.s32 1, %s12
    $region7: #{simple_cnn_forward.1} parent=1 // loop_footer_branch
      %11 = sbr.rel target = $region3
    $region8: #{simple_cnn_forward.1} parent=1 // loop_exit
      _
    %1162 = vsyncpa [#allocation3], 1
    %s1163 = scalar_lea.sflag [#allocation3], 1
    %1164 = vsyncpa %s1163, 1
    %1165 = vsyncpa [#allocation5], 1

</llo_original>
